<compile_context>
chip_gen: v6e
topology: v6e:2x2x1
jax: 0.10.0
libtpu: 0.0.40
codegen_flags: <defaults>
</compile_context>

<pallas_src>
import jax
import jax.numpy as jnp
from jax.experimental import pallas as pl
from jax.experimental.pallas import tpu as pltpu


def _round_up(x, m):
    return (x + m - 1) // m * m


# ----------------------------- Pallas kernel ------------------------------ #
def ordtri_kernel(xa_ref, xb_ref, ef_ref, pv_ref,
                  w1a_ref, w1b_ref, w1e_ref, w1p_ref, b1_ref,
                  w2_ref, b2_ref, w3_ref, b3_ref, o_ref):
    mxu_dt = w1a_ref.dtype  # bf16 MXU-input dtype (f32 accumulation below)

    # Layer 1: concat + (xa - xb) folded into split weight blocks.
    h1 = jnp.dot(xa_ref[...].astype(mxu_dt), w1a_ref[...],
                 preferred_element_type=jnp.float32)
    h1 += jnp.dot(xb_ref[...].astype(mxu_dt), w1b_ref[...],
                  preferred_element_type=jnp.float32)
    h1 += jnp.dot(ef_ref[...].astype(mxu_dt), w1e_ref[...],
                  preferred_element_type=jnp.float32)
    h1 += jnp.dot(pv_ref[...].astype(mxu_dt), w1p_ref[...],
                  preferred_element_type=jnp.float32)
    h1 = jnp.maximum(h1 + b1_ref[...], 0.0)                   # f32, (TB, 128)

    # Layer 2.
    h2 = jnp.dot(h1.astype(mxu_dt), w2_ref[...],
                 preferred_element_type=jnp.float32)
    h2 = jnp.maximum(h2 + b2_ref[...], 0.0)                    # f32, (TB, 64)

    # Layer 3: output lanes padded to 128 -> dense, unmasked store.
    y = jnp.dot(h2.astype(mxu_dt), w3_ref[...],
                preferred_element_type=jnp.float32)
    o_ref[...] = (y + b3_ref[...]).astype(o_ref.dtype)         # (TB, 128)


# ------------------------ one-time parameter prep -------------------------- #
def prepare_ordtri_params(params, dim, k, mxu_dtype=jnp.bfloat16):
    """Fold the concat into W1 row-blocks, pad W3/b3 to 128 lanes, cast for MXU."""
    w1, b1, w2, b2, w3, b3 = params
    w1a = w1[:dim] + w1[2 * dim:3 * dim]            # multiplies xa
    w1b = w1[dim:2 * dim] - w1[2 * dim:3 * dim]     # multiplies xb
    w1e = w1[3 * dim:3 * dim + 6]                   # multiplies edge_feats
    w1p = w1[3 * dim + 6:]                          # multiplies probs_vec

    n_pad = _round_up(max(k, 128), 128)             # lane-dense output width
    w3p = jnp.zeros((w3.shape[0], n_pad), w3.dtype).at[:, :k].set(w3)
    b3p = jnp.zeros((1, n_pad), b3.dtype).at[:, :k].set(b3.reshape(1, -1))

    cast = lambda w: w.astype(mxu_dtype)
    return (cast(w1a), cast(w1b), cast(w1e), cast(w1p), b1.astype(jnp.float32),
            cast(w2), b2.astype(jnp.float32), cast(w3p),
            b3p.astype(jnp.float32))


# ------------------------------ JAX wrapper -------------------------------- #
def ordtri_forward(xa, xb, edge_feats, probs_vec, prepped, k, *, tb=512):
    w1a, w1b, w1e, w1p, b1, w2, b2, w3p, b3p = prepped
    B, dim = xa.shape
    n_ef = edge_feats.shape[1]
    n_pv = probs_vec.shape[1]
    n_out = w3p.shape[1]

    # Batch tiling: TB rows per grid step (multiple of 8); pad B so it divides.
    TB = min(tb, _round_up(B, 8))
    B_pad = _round_up(B, TB)
    if B_pad != B:
        pad = lambda a: jnp.pad(a, ((0, B_pad - B), (0, 0)))
        xa, xb, edge_feats, probs_vec = map(pad, (xa, xb, edge_feats, probs_vec))

    vmem = pltpu.MemorySpace.VMEM
    row_spec = lambda d: pl.BlockSpec((TB, d), lambda i: (i, 0),
                                      memory_space=vmem)
    const_spec = lambda a: pl.BlockSpec(a.shape, lambda i: (0, 0),
                                        memory_space=vmem)

    out = pl.pallas_call(
        ordtri_kernel,
        out_shape=jax.ShapeDtypeStruct((B_pad, n_out), jnp.float32),
        grid=(B_pad // TB,),
        in_specs=[
            row_spec(dim), row_spec(dim), row_spec(n_ef), row_spec(n_pv),
            const_spec(w1a), const_spec(w1b), const_spec(w1e), const_spec(w1p),
            const_spec(b1), const_spec(w2), const_spec(b2),
            const_spec(w3p), const_spec(b3p),
        ],
        out_specs=row_spec(n_out),
        compiler_params=pltpu.CompilerParams(
            dimension_semantics=("parallel",),   # both TCs on v7x; harmless elsewhere
        ),
    )(xa, xb, edge_feats, probs_vec,
      w1a, w1b, w1e, w1p, b1, w2, b2, w3p, b3p)

    return out[:B, :k]


# --------------------------- deterministic init ----------------------------- #
def init_ordtri_params(key, dim, k):
    in_dim = dim * 3 + 6 + 3 * k
    dims = [(in_dim, 128), (128, 64), (64, k)]
    params = []
    for fi, fo in dims:
        kw, kb, key = jax.random.split(key, 3)
        bound = 1.0 / jnp.sqrt(jnp.float32(fi))
        w = jax.random.uniform(kw, (fi, fo), jnp.float32, -bound, bound)
        b = jax.random.uniform(kb, (1, fo), jnp.float32, -bound, bound)
        params += [w, b]
    return tuple(params)


def ordtri_reference(xa, xb, edge_feats, probs_vec, params):
    w1, b1, w2, b2, w3, b3 = params
    x = jnp.concatenate([xa, xb, xa - xb, edge_feats, probs_vec], axis=-1)
    h1 = jnp.maximum(x @ w1 + b1, 0.0)
    h2 = jnp.maximum(h1 @ w2 + b2, 0.0)
    return h2 @ w3 + b3


# --------------------------------- main ------------------------------------ #
if __name__ == "__main__":
    B, dim, k = 8, 32, 4

    key = jax.random.PRNGKey(0)
    k_xa, k_xb, k_ef, k_pv, k_params = jax.random.split(key, 5)

    xa = jax.random.normal(k_xa, (B, dim), jnp.float32)
    xb = jax.random.normal(k_xb, (B, dim), jnp.float32)
    edge_feats = jax.random.normal(k_ef, (B, 6), jnp.float32)
    probs_vec = jax.random.normal(k_pv, (B, 3 * k), jnp.float32)

    params = init_ordtri_params(k_params, dim, k)
    prepped = prepare_ordtri_params(params, dim, k, mxu_dtype=jnp.bfloat16)

    out = ordtri_forward(xa, xb, edge_feats, probs_vec, prepped, k)
    out = jax.block_until_ready(out)

    ref = ordtri_reference(xa, xb, edge_feats, probs_vec, params)
    assert out.shape == (B, k), out.shape
    # bf16 MXU inputs (f32 accumulation) vs. full-f32 reference: bf16 tolerance.
    max_err = float(jnp.max(jnp.abs(out - ref)))
    assert jnp.allclose(out, ref, atol=2e-2, rtol=2e-2), max_err

    print("KERNEL_OK")
</pallas_src>

<mosaic_0001>
module attributes {stable_mosaic.version = 11 : i64} {
  func.func @ordtri_kernel(%arg0: i32, %arg1: memref<8x32xf32, #tpu.memory_space<vmem>>, %arg2: memref<8x32xf32, #tpu.memory_space<vmem>>, %arg3: memref<8x6xf32, #tpu.memory_space<vmem>>, %arg4: memref<8x12xf32, #tpu.memory_space<vmem>>, %arg5: memref<32x128xbf16, #tpu.memory_space<vmem>>, %arg6: memref<32x128xbf16, #tpu.memory_space<vmem>>, %arg7: memref<6x128xbf16, #tpu.memory_space<vmem>>, %arg8: memref<12x128xbf16, #tpu.memory_space<vmem>>, %arg9: memref<1x128xf32, #tpu.memory_space<vmem>>, %arg10: memref<128x64xbf16, #tpu.memory_space<vmem>>, %arg11: memref<1x64xf32, #tpu.memory_space<vmem>>, %arg12: memref<64x128xbf16, #tpu.memory_space<vmem>>, %arg13: memref<1x128xf32, #tpu.memory_space<vmem>>, %arg14: memref<8x128xf32, #tpu.memory_space<vmem>>) attributes {dimension_semantics = [#tpu.dimension_semantics<parallel>], iteration_bounds = array<i64: 1>, scalar_prefetch = 0 : i64, scratch_operands = 0 : i64, tpu.core_type = #tpu.core_type<tc>, window_params = [{transform_indices = @transform_0, window_bounds = array<i64: 8, 32>}, {transform_indices = @transform_1, window_bounds = array<i64: 8, 32>}, {transform_indices = @transform_2, window_bounds = array<i64: 8, 6>}, {transform_indices = @transform_3, window_bounds = array<i64: 8, 12>}, {pipeline_mode = #tpu.pipeline_mode<synchronous>, transform_indices = @transform_4, window_bounds = array<i64: 32, 128>}, {pipeline_mode = #tpu.pipeline_mode<synchronous>, transform_indices = @transform_5, window_bounds = array<i64: 32, 128>}, {pipeline_mode = #tpu.pipeline_mode<synchronous>, transform_indices = @transform_6, window_bounds = array<i64: 6, 128>}, {pipeline_mode = #tpu.pipeline_mode<synchronous>, transform_indices = @transform_7, window_bounds = array<i64: 12, 128>}, {pipeline_mode = #tpu.pipeline_mode<synchronous>, transform_indices = @transform_8, window_bounds = array<i64: 1, 128>}, {pipeline_mode = #tpu.pipeline_mode<synchronous>, transform_indices = @transform_9, window_bounds = array<i64: 128, 64>}, {pipeline_mode = #tpu.pipeline_mode<synchronous>, transform_indices = @transform_10, window_bounds = array<i64: 1, 64>}, {pipeline_mode = #tpu.pipeline_mode<synchronous>, transform_indices = @transform_11, window_bounds = array<i64: 64, 128>}, {pipeline_mode = #tpu.pipeline_mode<synchronous>, transform_indices = @transform_12, window_bounds = array<i64: 1, 128>}, {transform_indices = @transform_13, window_bounds = array<i64: 8, 128>}]} {
    %c0 = arith.constant 0 : index
    %c0_0 = arith.constant 0 : index
    %0 = vector.load %arg1[%c0, %c0_0] : memref<8x32xf32, #tpu.memory_space<vmem>>, vector<8x32xf32>
    %1 = arith.truncf %0 : vector<8x32xf32> to vector<8x32xbf16>
    %c0_1 = arith.constant 0 : index
    %c0_2 = arith.constant 0 : index
    %2 = vector.load %arg5[%c0_1, %c0_2] : memref<32x128xbf16, #tpu.memory_space<vmem>>, vector<32x128xbf16>
    %cst = arith.constant dense<0.000000e+00> : vector<8x128xf32>
    %3 = tpu.matmul %1, %2, %cst {dimension_numbers = #tpu.dot_dimension_numbers<[1], [0], [0], [1], [0, 0, 1, 1], [], []>} : vector<8x32xbf16>, vector<32x128xbf16>, vector<8x128xf32> -> vector<8x128xf32>
    %c0_3 = arith.constant 0 : index
    %c0_4 = arith.constant 0 : index
    %4 = vector.load %arg2[%c0_3, %c0_4] : memref<8x32xf32, #tpu.memory_space<vmem>>, vector<8x32xf32>
    %5 = arith.truncf %4 : vector<8x32xf32> to vector<8x32xbf16>
    %c0_5 = arith.constant 0 : index
    %c0_6 = arith.constant 0 : index
    %6 = vector.load %arg6[%c0_5, %c0_6] : memref<32x128xbf16, #tpu.memory_space<vmem>>, vector<32x128xbf16>
    %cst_7 = arith.constant dense<0.000000e+00> : vector<8x128xf32>
    %7 = tpu.matmul %5, %6, %cst_7 {dimension_numbers = #tpu.dot_dimension_numbers<[1], [0], [0], [1], [0, 0, 1, 1], [], []>} : vector<8x32xbf16>, vector<32x128xbf16>, vector<8x128xf32> -> vector<8x128xf32>
    %8 = arith.addf %3, %7 : vector<8x128xf32>
    %c0_8 = arith.constant 0 : index
    %c0_9 = arith.constant 0 : index
    %9 = vector.load %arg3[%c0_8, %c0_9] : memref<8x6xf32, #tpu.memory_space<vmem>>, vector<8x6xf32>
    %10 = arith.truncf %9 : vector<8x6xf32> to vector<8x6xbf16>
    %c0_10 = arith.constant 0 : index
    %c0_11 = arith.constant 0 : index
    %11 = vector.load %arg7[%c0_10, %c0_11] : memref<6x128xbf16, #tpu.memory_space<vmem>>, vector<6x128xbf16>
    %cst_12 = arith.constant dense<0.000000e+00> : vector<8x128xf32>
    %12 = tpu.matmul %10, %11, %cst_12 {dimension_numbers = #tpu.dot_dimension_numbers<[1], [0], [0], [1], [0, 0, 1, 1], [], []>} : vector<8x6xbf16>, vector<6x128xbf16>, vector<8x128xf32> -> vector<8x128xf32>
    %13 = arith.addf %8, %12 : vector<8x128xf32>
    %c0_13 = arith.constant 0 : index
    %c0_14 = arith.constant 0 : index
    %14 = vector.load %arg4[%c0_13, %c0_14] : memref<8x12xf32, #tpu.memory_space<vmem>>, vector<8x12xf32>
    %15 = arith.truncf %14 : vector<8x12xf32> to vector<8x12xbf16>
    %c0_15 = arith.constant 0 : index
    %c0_16 = arith.constant 0 : index
    %16 = vector.load %arg8[%c0_15, %c0_16] : memref<12x128xbf16, #tpu.memory_space<vmem>>, vector<12x128xbf16>
    %cst_17 = arith.constant dense<0.000000e+00> : vector<8x128xf32>
    %17 = tpu.matmul %15, %16, %cst_17 {dimension_numbers = #tpu.dot_dimension_numbers<[1], [0], [0], [1], [0, 0, 1, 1], [], []>} : vector<8x12xbf16>, vector<12x128xbf16>, vector<8x128xf32> -> vector<8x128xf32>
    %18 = arith.addf %13, %17 : vector<8x128xf32>
    %c0_18 = arith.constant 0 : index
    %c0_19 = arith.constant 0 : index
    %19 = vector.load %arg9[%c0_18, %c0_19] : memref<1x128xf32, #tpu.memory_space<vmem>>, vector<1x128xf32>
    %20 = vector.broadcast %19 : vector<1x128xf32> to vector<8x128xf32>
    %21 = arith.addf %18, %20 : vector<8x128xf32>
    %cst_20 = arith.constant 0.000000e+00 : f32
    %22 = vector.broadcast %cst_20 : f32 to vector<8x128xf32>
    %23 = arith.maximumf %21, %22 : vector<8x128xf32>
    %24 = arith.truncf %23 : vector<8x128xf32> to vector<8x128xbf16>
    %c0_21 = arith.constant 0 : index
    %c0_22 = arith.constant 0 : index
    %25 = vector.load %arg10[%c0_21, %c0_22] : memref<128x64xbf16, #tpu.memory_space<vmem>>, vector<128x64xbf16>
    %cst_23 = arith.constant dense<0.000000e+00> : vector<8x64xf32>
    %26 = tpu.matmul %24, %25, %cst_23 {dimension_numbers = #tpu.dot_dimension_numbers<[1], [0], [0], [1], [0, 0, 1, 1], [], []>} : vector<8x128xbf16>, vector<128x64xbf16>, vector<8x64xf32> -> vector<8x64xf32>
    %c0_24 = arith.constant 0 : index
    %c0_25 = arith.constant 0 : index
    %27 = vector.load %arg11[%c0_24, %c0_25] : memref<1x64xf32, #tpu.memory_space<vmem>>, vector<1x64xf32>
    %28 = vector.broadcast %27 : vector<1x64xf32> to vector<8x64xf32>
    %29 = arith.addf %26, %28 : vector<8x64xf32>
    %cst_26 = arith.constant 0.000000e+00 : f32
    %30 = vector.broadcast %cst_26 : f32 to vector<8x64xf32>
    %31 = arith.maximumf %29, %30 : vector<8x64xf32>
    %32 = arith.truncf %31 : vector<8x64xf32> to vector<8x64xbf16>
    %c0_27 = arith.constant 0 : index
    %c0_28 = arith.constant 0 : index
    %33 = vector.load %arg12[%c0_27, %c0_28] : memref<64x128xbf16, #tpu.memory_space<vmem>>, vector<64x128xbf16>
    %cst_29 = arith.constant dense<0.000000e+00> : vector<8x128xf32>
    %34 = tpu.matmul %32, %33, %cst_29 {dimension_numbers = #tpu.dot_dimension_numbers<[1], [0], [0], [1], [0, 0, 1, 1], [], []>} : vector<8x64xbf16>, vector<64x128xbf16>, vector<8x128xf32> -> vector<8x128xf32>
    %c0_30 = arith.constant 0 : index
    %c0_31 = arith.constant 0 : index
    %35 = vector.load %arg13[%c0_30, %c0_31] : memref<1x128xf32, #tpu.memory_space<vmem>>, vector<1x128xf32>
    %36 = vector.broadcast %35 : vector<1x128xf32> to vector<8x128xf32>
    %37 = arith.addf %34, %36 : vector<8x128xf32>
    %c0_32 = arith.constant 0 : index
    %c0_33 = arith.constant 0 : index
    %38 = vector.load %arg14[%c0_32, %c0_33] : memref<8x128xf32, #tpu.memory_space<vmem>>, vector<8x128xf32>
    tpu.vector_store %arg14[%c0_32, %c0_33], %37 {strides = array<i32>} : memref<8x128xf32, #tpu.memory_space<vmem>>, vector<8x128xf32>,
    return
  }
  func.func @transform_0(%arg0: i32) -> (i32, i32) {
    %c0_i32 = arith.constant 0 : i32
    %c0_i32_0 = arith.constant 0 : i32
    return %arg0, %c0_i32 : i32, i32
  }
  func.func @transform_1(%arg0: i32) -> (i32, i32) {
    %c0_i32 = arith.constant 0 : i32
    %c0_i32_0 = arith.constant 0 : i32
    return %arg0, %c0_i32 : i32, i32
  }
  func.func @transform_2(%arg0: i32) -> (i32, i32) {
    %c0_i32 = arith.constant 0 : i32
    %c0_i32_0 = arith.constant 0 : i32
    return %arg0, %c0_i32 : i32, i32
  }
  func.func @transform_3(%arg0: i32) -> (i32, i32) {
    %c0_i32 = arith.constant 0 : i32
    %c0_i32_0 = arith.constant 0 : i32
    return %arg0, %c0_i32 : i32, i32
  }
  func.func @transform_4(%arg0: i32) -> (i32, i32) {
    %c0_i32 = arith.constant 0 : i32
    %c0_i32_0 = arith.constant 0 : i32
    %c0_i32_1 = arith.constant 0 : i32
    return %c0_i32, %c0_i32_0 : i32, i32
  }
  func.func @transform_5(%arg0: i32) -> (i32, i32) {
    %c0_i32 = arith.constant 0 : i32
    %c0_i32_0 = arith.constant 0 : i32
    %c0_i32_1 = arith.constant 0 : i32
    return %c0_i32, %c0_i32_0 : i32, i32
  }
  func.func @transform_6(%arg0: i32) -> (i32, i32) {
    %c0_i32 = arith.constant 0 : i32
    %c0_i32_0 = arith.constant 0 : i32
    %c0_i32_1 = arith.constant 0 : i32
    return %c0_i32, %c0_i32_0 : i32, i32
  }
  func.func @transform_7(%arg0: i32) -> (i32, i32) {
    %c0_i32 = arith.constant 0 : i32
    %c0_i32_0 = arith.constant 0 : i32
    %c0_i32_1 = arith.constant 0 : i32
    return %c0_i32, %c0_i32_0 : i32, i32
  }
  func.func @transform_8(%arg0: i32) -> (i32, i32) {
    %c0_i32 = arith.constant 0 : i32
    %c0_i32_0 = arith.constant 0 : i32
    %c0_i32_1 = arith.constant 0 : i32
    return %c0_i32, %c0_i32_0 : i32, i32
  }
  func.func @transform_9(%arg0: i32) -> (i32, i32) {
    %c0_i32 = arith.constant 0 : i32
    %c0_i32_0 = arith.constant 0 : i32
    %c0_i32_1 = arith.constant 0 : i32
    return %c0_i32, %c0_i32_0 : i32, i32
  }
  func.func @transform_10(%arg0: i32) -> (i32, i32) {
    %c0_i32 = arith.constant 0 : i32
    %c0_i32_0 = arith.constant 0 : i32
    %c0_i32_1 = arith.constant 0 : i32
    return %c0_i32, %c0_i32_0 : i32, i32
  }
  func.func @transform_11(%arg0: i32) -> (i32, i32) {
    %c0_i32 = arith.constant 0 : i32
    %c0_i32_0 = arith.constant 0 : i32
    %c0_i32_1 = arith.constant 0 : i32
    return %c0_i32, %c0_i32_0 : i32, i32
  }
  func.func @transform_12(%arg0: i32) -> (i32, i32) {
    %c0_i32 = arith.constant 0 : i32
    %c0_i32_0 = arith.constant 0 : i32
    %c0_i32_1 = arith.constant 0 : i32
    return %c0_i32, %c0_i32_0 : i32, i32
  }
  func.func @transform_13(%arg0: i32) -> (i32, i32) {
    %c0_i32 = arith.constant 0 : i32
    %c0_i32_0 = arith.constant 0 : i32
    return %arg0, %c0_i32 : i32, i32
  }
}

</mosaic_0001>

<llo_original>
// kernel: tpu_custom_call.1
$region0: #{tpu_custom_call.1}
  #allocation0 [shape = 'u32[]', space=smem, size = 0x4, offset = 0x4, fixed_abs, tag = 'smem constant byte address 0x4 - core index']
  #allocation1 [shape = 'u32[144,128]{1,0:T(1,128)}', space=vmem, size = 0x12000, scoped, tag = 'internal scratch']
  %s0 = inlined_call_operand.vmem [shape: f32[8,32], index: 0, kind: input, shape index: {}]
  %s1 = inlined_call_operand.vmem [shape: f32[8,32], index: 1, kind: input, shape index: {}]
  %s2 = inlined_call_operand.vmem [shape: f32[8,6], index: 2, kind: input, shape index: {}]
  %s3 = inlined_call_operand.vmem [shape: f32[8,12], index: 3, kind: input, shape index: {}]
  %s4 = inlined_call_operand.vmem [shape: bf16[32,128], index: 4, kind: input, shape index: {}]
  %s5 = inlined_call_operand.vmem [shape: bf16[32,128], index: 5, kind: input, shape index: {}]
  %s6 = inlined_call_operand.hbm [shape: bf16[6,128], index: 6, kind: input, shape index: {}]
  %s7 = inlined_call_operand.vmem [shape: bf16[12,128], index: 7, kind: input, shape index: {}]
  %s8 = inlined_call_operand.vmem [shape: f32[1,128], index: 8, kind: input, shape index: {}]
  %s9 = inlined_call_operand.vmem [shape: bf16[128,64], index: 9, kind: input, shape index: {}]
  %s10 = inlined_call_operand.vmem [shape: f32[1,64], index: 10, kind: input, shape index: {}]
  %s11 = inlined_call_operand.vmem [shape: bf16[64,128], index: 11, kind: input, shape index: {}]
  %s12 = inlined_call_operand.vmem [shape: f32[1,128], index: 12, kind: input, shape index: {}]
  %s13 = inlined_call_operand.hbm [shape: f32[8,128], index: 13, kind: output, shape index: {}]
  %s14 = sld [smem:[#allocation0]]
  $region66: #{tpu_custom_call.1} parent=0
    _
  %s16 = ssub.s32 1, %s14
  %s17 = scalar_select 0, %s16, %s14
  $region1: #{tpu_custom_call.1} parent=0
    #allocation2 [shape = 'u8[2048]{0}', space=vmem, size = 0x800, scoped, tag = 'input window, operand 6, single buffered']
    #allocation3 [shape = 's32[1]{0}', space=sflag, size = 0x4, scoped, tag = 'scoped memory for tpu_custom_call.1']
    #allocation4 [shape = 's32[1]{0}', space=sflag, size = 0x4, scoped, tag = 'scoped memory for tpu_custom_call.1']
    #allocation5 [shape = 'u8[4096]{0}', space=vmem, size = 0x1000, scoped, tag = 'output window, operand 0, single buffered']
    %18 = vsyncpa [#allocation3], 0
    %19 = vsyncpa [#allocation4], 0
    // Predicated region
    $region2: #{tpu_custom_call.1} parent=1 // pred_check
      _
    $region3: #{tpu_custom_call.1} parent=1 // pred_check_branch
      %21 = sbr.rel (0) target = $region5
    $region4: #{tpu_custom_call.1} parent=1 // pred_region
      _
    $region5: #{tpu_custom_call.1} parent=1 // pred_fallthru
      _
    // Predicated region
    $region6: #{tpu_custom_call.1} parent=1 // pred_check
      _
    $region7: #{tpu_custom_call.1} parent=1 // pred_check_branch
      %23 = sbr.rel (0) target = $region9
    $region8: #{tpu_custom_call.1} parent=1 // pred_region
      _
    $region9: #{tpu_custom_call.1} parent=1 // pred_fallthru
      _
    // Predicated region
    $region10: #{tpu_custom_call.1} parent=1 // pred_check
      _
    $region11: #{tpu_custom_call.1} parent=1 // pred_check_branch
      %25 = sbr.rel (0) target = $region13
    $region12: #{tpu_custom_call.1} parent=1 // pred_region
      _
    $region13: #{tpu_custom_call.1} parent=1 // pred_fallthru
      _
    // Predicated region
    $region14: #{tpu_custom_call.1} parent=1 // pred_check
      _
    $region15: #{tpu_custom_call.1} parent=1 // pred_check_branch
      %27 = sbr.rel (0) target = $region17
    $region16: #{tpu_custom_call.1} parent=1 // pred_region
      _
    $region17: #{tpu_custom_call.1} parent=1 // pred_fallthru
      _
    // Predicated region
    $region18: #{tpu_custom_call.1} parent=1 // pred_check
      _
    $region19: #{tpu_custom_call.1} parent=1 // pred_check_branch
      %29 = sbr.rel (0) target = $region21
    $region20: #{tpu_custom_call.1} parent=1 // pred_region
      _
    $region21: #{tpu_custom_call.1} parent=1 // pred_fallthru
      _
    // Predicated region
    $region22: #{tpu_custom_call.1} parent=1 // pred_check
      _
    $region23: #{tpu_custom_call.1} parent=1 // pred_check_branch
      %31 = sbr.rel (0) target = $region25
    $region24: #{tpu_custom_call.1} parent=1 // pred_region
      _
    $region25: #{tpu_custom_call.1} parent=1 // pred_fallthru
      _
    // Predicated region
    $region26: #{tpu_custom_call.1} parent=1 // pred_check
      _
    $region27: #{tpu_custom_call.1} parent=1 // pred_check_branch
      %33 = sbr.rel (0) target = $region29
    $region28: #{tpu_custom_call.1} parent=1 // pred_region
      %s35 = ssub.s32 64, 64
      %36 = vsyncadd [#allocation3], %s35
      %s38 = sshll.u32 [#allocation2], 4
      %s39 = int_to_ptr.vmem [resolvable:$true] %s38
      %41 = dma.hbm_to_vmem [thread:$0]  %s6, 64, %s39, [#allocation3]
    $region29: #{tpu_custom_call.1} parent=1 // pred_fallthru
      _
    // Predicated region
    $region30: #{tpu_custom_call.1} parent=1 // pred_check
      _
    $region31: #{tpu_custom_call.1} parent=1 // pred_check_branch
      %43 = sbr.rel (0) target = $region33
    $region32: #{tpu_custom_call.1} parent=1 // pred_region
      _
    $region33: #{tpu_custom_call.1} parent=1 // pred_fallthru
      _
    // Predicated region
    $region34: #{tpu_custom_call.1} parent=1 // pred_check
      _
    $region35: #{tpu_custom_call.1} parent=1 // pred_check_branch
      %45 = sbr.rel (0) target = $region37
    $region36: #{tpu_custom_call.1} parent=1 // pred_region
      _
    $region37: #{tpu_custom_call.1} parent=1 // pred_fallthru
      _
    // Predicated region
    $region38: #{tpu_custom_call.1} parent=1 // pred_check
      _
    $region39: #{tpu_custom_call.1} parent=1 // pred_check_branch
      %47 = sbr.rel (0) target = $region41
    $region40: #{tpu_custom_call.1} parent=1 // pred_region
      _
    $region41: #{tpu_custom_call.1} parent=1 // pred_fallthru
      _
    // Predicated region
    $region42: #{tpu_custom_call.1} parent=1 // pred_check
      _
    $region43: #{tpu_custom_call.1} parent=1 // pred_check_branch
      %49 = sbr.rel (0) target = $region45
    $region44: #{tpu_custom_call.1} parent=1 // pred_region
      _
    $region45: #{tpu_custom_call.1} parent=1 // pred_fallthru
      _
    // Predicated region
    $region46: #{tpu_custom_call.1} parent=1 // pred_check
      _
    $region47: #{tpu_custom_call.1} parent=1 // pred_check_branch
      %51 = sbr.rel (0) target = $region49
    $region48: #{tpu_custom_call.1} parent=1 // pred_region
      _
    $region49: #{tpu_custom_call.1} parent=1 // pred_fallthru
      _
    // Predicated region
    $region50: #{tpu_custom_call.1} parent=1 // pred_check
      _
    $region51: #{tpu_custom_call.1} parent=1 // pred_check_branch
      %53 = sbr.rel (0) target = $region53
    $region52: #{tpu_custom_call.1} parent=1 // pred_region
      _
    $region53: #{tpu_custom_call.1} parent=1 // pred_fallthru
      _
    // Predicated region
    $region54: #{tpu_custom_call.1} parent=1 // pred_check
      _
    $region55: #{tpu_custom_call.1} parent=1 // pred_check_branch
      %55 = sbr.rel (0) target = $region57
    $region56: #{tpu_custom_call.1} parent=1 // pred_region
      %56 = dma.done [#allocation3], 64
    $region57: #{tpu_custom_call.1} parent=1 // pred_fallthru
      _
    %v58 = vld [vmem:[%s0] sm:$0xff]
    %v59 = vpack.c.bf16 %v58, %v58
    %v60 = vld [vmem:[%s4] sm:$0xf]
    %v61 = vld [vmem:[%s4 + $0x4] sm:$0xf]
    %v62 = vld [vmem:[%s4 + $0x8] sm:$0xf]
    %v63 = vld [vmem:[%s4 + $0xc] sm:$0xf]
    %v64 = vld [vmem:[%s1] sm:$0xff]
    %v65 = vpack.c.bf16 %v64, %v64
    %v66 = vld [vmem:[%s5] sm:$0xf]
    %v67 = vld [vmem:[%s5 + $0x4] sm:$0xf]
    %v68 = vld [vmem:[%s5 + $0x8] sm:$0xf]
    %v69 = vld [vmem:[%s5 + $0xc] sm:$0xf]
    %v74 = vunpack.c.l.b16 %v66
    %v75 = vunpack.c.l.b16 %v67
    %v76 = vunpack.c.l.b16 %v68
    %v77 = vunpack.c.l.b16 %v69
    %v78 = vpack.c.b16 %v75, %v74
    %v79 = vpack.c.b16 %v77, %v76
    %vm82 = vcmask 261120
    %v84 = vsel %vm82, %v65, 0
    %86 = vmatprep.subr.bf16.mxu0 0
    %87 = vmatpush1.bf16.msra.mxu0 0
    %88 = vmatprep.subr.bf16.mxu0 0
    %89 = vmatpush1.bf16.msra.mxu0 0
    %90 = vmatprep.subr.bf16.mxu0 0
    %91 = vmatpush1.bf16.msra.mxu0 0
    %92 = vmatprep.subr.bf16.mxu0 0
    %93 = vmatpush1.bf16.msra.mxu0 0
    %94 = vmatprep.subr.bf16.mxu0 0
    %95 = vmatpush1.bf16.msra.mxu0 0
    %96 = vmatprep.subr.bf16.mxu0 0
    %97 = vmatpush1.bf16.msra.mxu0 0
    %98 = vmatprep.subr.bf16.mxu0 0
    %99 = vmatpush1.bf16.msra.mxu0 %v79
    %100 = vmatprep.subr.bf16.mxu0 0
    %101 = vmatpush1.bf16.msra.mxu0 %v78
    %102 = vmatprep.subr.bf16.mxu0 0
    %103 = vmatpush2.bf16.msra.mxu0 0
    %104 = vmatprep.subr.bf16.mxu0 0
    %105 = vmatpush2.bf16.msra.mxu0 0
    %106 = vmatprep.subr.bf16.mxu0 0
    %107 = vmatpush2.bf16.msra.mxu0 0
    %108 = vmatprep.subr.bf16.mxu0 0
    %109 = vmatpush2.bf16.msra.mxu0 0
    %110 = vmatprep.subr.bf16.mxu0 0
    %111 = vmatpush2.bf16.msra.mxu0 0
    %112 = vmatprep.subr.bf16.mxu0 0
    %113 = vmatpush2.bf16.msra.mxu0 0
    %114 = vmatprep.subr.bf16.mxu0 0
    %115 = vmatpush2.bf16.msra.mxu0 0
    %116 = vmatprep.subr.bf16.mxu0 0
    %117 = vmatpush2.bf16.msra.mxu0 0
    %118 = vmatprep.mubr.bf16.mxu0 0
    %119 = vmatmul.mubr.bf16.gmra.mxu0 %v84
    %v120 = vpop.f32.mrf.mxu0
    %v121 = vadd.f32 0.0, %v120
    %v122 = vpop.f32.mrf.mxu0
    %v123 = vpop.f32.mrf.mxu0
    %v124 = vpop.f32.mrf.mxu0
    %125 = vdwg.mxu0
    %v130 = vunpack.c.l.b16 %v60
    %v131 = vunpack.c.l.b16 %v61
    %v132 = vunpack.c.l.b16 %v62
    %v133 = vunpack.c.l.b16 %v63
    %v134 = vpack.c.b16 %v131, %v130
    %v135 = vpack.c.b16 %v133, %v132
    %v139 = vsel %vm82, %v59, 0
    %141 = vmatprep.subr.bf16.mxu0 0
    %142 = vmatpush1.bf16.msra.mxu0 0
    %143 = vmatprep.subr.bf16.mxu0 0
    %144 = vmatpush1.bf16.msra.mxu0 0
    %145 = vmatprep.subr.bf16.mxu0 0
    %146 = vmatpush1.bf16.msra.mxu0 0
    %147 = vmatprep.subr.bf16.mxu0 0
    %148 = vmatpush1.bf16.msra.mxu0 0
    %149 = vmatprep.subr.bf16.mxu0 0
    %150 = vmatpush1.bf16.msra.mxu0 0
    %151 = vmatprep.subr.bf16.mxu0 0
    %152 = vmatpush1.bf16.msra.mxu0 0
    %153 = vmatprep.subr.bf16.mxu0 0
    %154 = vmatpush1.bf16.msra.mxu0 %v135
    %155 = vmatprep.subr.bf16.mxu0 0
    %156 = vmatpush1.bf16.msra.mxu0 %v134
    %157 = vmatprep.subr.bf16.mxu0 0
    %158 = vmatpush2.bf16.msra.mxu0 0
    %159 = vmatprep.subr.bf16.mxu0 0
    %160 = vmatpush2.bf16.msra.mxu0 0
    %161 = vmatprep.subr.bf16.mxu0 0
    %162 = vmatpush2.bf16.msra.mxu0 0
    %163 = vmatprep.subr.bf16.mxu0 0
    %164 = vmatpush2.bf16.msra.mxu0 0
    %165 = vmatprep.subr.bf16.mxu0 0
    %166 = vmatpush2.bf16.msra.mxu0 0
    %167 = vmatprep.subr.bf16.mxu0 0
    %168 = vmatpush2.bf16.msra.mxu0 0
    %169 = vmatprep.subr.bf16.mxu0 0
    %170 = vmatpush2.bf16.msra.mxu0 0
    %171 = vmatprep.subr.bf16.mxu0 0
    %172 = vmatpush2.bf16.msra.mxu0 0
    %173 = vmatprep.mubr.bf16.mxu0 0
    %174 = vmatmul.mubr.bf16.gmra.mxu0 %v139
    %v175 = vpop.f32.mrf.mxu0
    %v176 = vadd.f32 %v121, %v175
    %v177 = vpop.f32.mrf.mxu0
    %v178 = vpop.f32.mrf.mxu0
    %v179 = vpop.f32.mrf.mxu0
    %180 = vdwg.mxu0
    %v181 = vld [vmem:[%s2] sm:$0xff]
    %v182 = vpack.c.bf16 %v181, %v181
    %v183 = vld [vmem:[#allocation2] sm:$0x7]
    %vm184 = vcmask 48128
    %v186 = vsel %vm184, %v182, 0
    %vm188 = vcmask 1042432
    %v190 = vsel %vm188, %v183, 0
    %192 = vmatprep.subr.bf16.mxu0 0
    %193 = vmatpush1.bf16.msra.mxu0 0
    %194 = vmatprep.subr.bf16.mxu0 0
    %195 = vmatpush1.bf16.msra.mxu0 0
    %196 = vmatprep.subr.bf16.mxu0 0
    %197 = vmatpush1.bf16.msra.mxu0 0
    %198 = vmatprep.subr.bf16.mxu0 0
    %199 = vmatpush1.bf16.msra.mxu0 0
    %200 = vmatprep.subr.bf16.mxu0 0
    %201 = vmatpush1.bf16.msra.mxu0 0
    %202 = vmatprep.subr.bf16.mxu0 0
    %203 = vmatpush1.bf16.msra.mxu0 0
    %204 = vmatprep.subr.bf16.mxu0 0
    %205 = vmatpush1.bf16.msra.mxu0 0
    %206 = vmatprep.subr.bf16.mxu0 0
    %207 = vmatpush1.bf16.msra.mxu0 %v190
    %208 = vmatprep.subr.bf16.mxu0 0
    %209 = vmatpush2.bf16.msra.mxu0 0
    %210 = vmatprep.subr.bf16.mxu0 0
    %211 = vmatpush2.bf16.msra.mxu0 0
    %212 = vmatprep.subr.bf16.mxu0 0
    %213 = vmatpush2.bf16.msra.mxu0 0
    %214 = vmatprep.subr.bf16.mxu0 0
    %215 = vmatpush2.bf16.msra.mxu0 0
    %216 = vmatprep.subr.bf16.mxu0 0
    %217 = vmatpush2.bf16.msra.mxu0 0
    %218 = vmatprep.subr.bf16.mxu0 0
    %219 = vmatpush2.bf16.msra.mxu0 0
    %220 = vmatprep.subr.bf16.mxu0 0
    %221 = vmatpush2.bf16.msra.mxu0 0
    %222 = vmatprep.subr.bf16.mxu0 0
    %223 = vmatpush2.bf16.msra.mxu0 0
    %224 = vmatprep.mubr.bf16.mxu0 0
    %225 = vmatmul.mubr.bf16.gmra.mxu0 %v186
    %v226 = vpop.f32.mrf.mxu0
    %v227 = vadd.f32 0.0, %v226
    %v228 = vpop.f32.mrf.mxu0
    %v229 = vpop.f32.mrf.mxu0
    %v230 = vpop.f32.mrf.mxu0
    %231 = vdwg.mxu0
    %v232 = vadd.f32 %v176, %v227
    %v233 = vld [vmem:[%s3] sm:$0xff]
    %v234 = vpack.c.bf16 %v233, %v233
    %v235 = vld [vmem:[%s7] sm:$0xf]
    %v236 = vld [vmem:[%s7 + $0x4] sm:$0x3]
    %v239 = vunpack.c.l.b16 %v235
    %v240 = vunpack.c.l.b16 %v236
    %v241 = vpack.c.b16 %v240, %v239
    %vm242 = vcmask 97280
    %v244 = vsel %vm242, %v234, 0
    %vm246 = vcmask 1045504
    %v248 = vsel %vm246, %v241, 0
    %250 = vmatprep.subr.bf16.mxu0 0
    %251 = vmatpush1.bf16.msra.mxu0 0
    %252 = vmatprep.subr.bf16.mxu0 0
    %253 = vmatpush1.bf16.msra.mxu0 0
    %254 = vmatprep.subr.bf16.mxu0 0
    %255 = vmatpush1.bf16.msra.mxu0 0
    %256 = vmatprep.subr.bf16.mxu0 0
    %257 = vmatpush1.bf16.msra.mxu0 0
    %258 = vmatprep.subr.bf16.mxu0 0
    %259 = vmatpush1.bf16.msra.mxu0 0
    %260 = vmatprep.subr.bf16.mxu0 0
    %261 = vmatpush1.bf16.msra.mxu0 0
    %262 = vmatprep.subr.bf16.mxu0 0
    %263 = vmatpush1.bf16.msra.mxu0 0
    %264 = vmatprep.subr.bf16.mxu0 0
    %265 = vmatpush1.bf16.msra.mxu0 %v248
    %266 = vmatprep.subr.bf16.mxu0 0
    %267 = vmatpush2.bf16.msra.mxu0 0
    %268 = vmatprep.subr.bf16.mxu0 0
    %269 = vmatpush2.bf16.msra.mxu0 0
    %270 = vmatprep.subr.bf16.mxu0 0
    %271 = vmatpush2.bf16.msra.mxu0 0
    %272 = vmatprep.subr.bf16.mxu0 0
    %273 = vmatpush2.bf16.msra.mxu0 0
    %274 = vmatprep.subr.bf16.mxu0 0
    %275 = vmatpush2.bf16.msra.mxu0 0
    %276 = vmatprep.subr.bf16.mxu0 0
    %277 = vmatpush2.bf16.msra.mxu0 0
    %278 = vmatprep.subr.bf16.mxu0 0
    %279 = vmatpush2.bf16.msra.mxu0 0
    %280 = vmatprep.subr.bf16.mxu0 0
    %281 = vmatpush2.bf16.msra.mxu0 0
    %282 = vmatprep.mubr.bf16.mxu0 0
    %283 = vmatmul.mubr.bf16.gmra.mxu0 %v244
    %v284 = vpop.f32.mrf.mxu0
    %v285 = vadd.f32 0.0, %v284
    %v286 = vpop.f32.mrf.mxu0
    %v287 = vpop.f32.mrf.mxu0
    %v288 = vpop.f32.mrf.mxu0
    %289 = vdwg.mxu0
    %v290 = vadd.f32 %v232, %v285
    %v291 = vld [vmem:[%s8] sm:$0x1]
    %v293 = vlaneseq
    %v294 = vshrl.u32 %v293, 7
    %v295 = vsub.s32 0, %v294
    %v296 = vrot.slane %v291, %v295
    %v298 = vadd.f32 %v290, %v296
    %v299 = vmax.f32 %v298, 0.0
    %v300 = vpack.c.bf16 %v299, %v299
    %v301 = vld [vmem:[%s9] sm:$0xf]
    %v302 = vld [vmem:[%s9 + $0x4] sm:$0xf]
    %v303 = vld [vmem:[%s9 + $0x8] sm:$0xf]
    %v304 = vld [vmem:[%s9 + $0xc] sm:$0xf]
    %v305 = vld [vmem:[%s9 + $0x10] sm:$0xf]
    %v306 = vld [vmem:[%s9 + $0x14] sm:$0xf]
    %v307 = vld [vmem:[%s9 + $0x18] sm:$0xf]
    %v308 = vld [vmem:[%s9 + $0x1c] sm:$0xf]
    %v309 = vld [vmem:[%s9 + $0x20] sm:$0xf]
    %v310 = vld [vmem:[%s9 + $0x24] sm:$0xf]
    %v311 = vld [vmem:[%s9 + $0x28] sm:$0xf]
    %v312 = vld [vmem:[%s9 + $0x2c] sm:$0xf]
    %v313 = vld [vmem:[%s9 + $0x30] sm:$0xf]
    %v314 = vld [vmem:[%s9 + $0x34] sm:$0xf]
    %v315 = vld [vmem:[%s9 + $0x38] sm:$0xf]
    %v316 = vld [vmem:[%s9 + $0x3c] sm:$0xf]
    %v317 = vld [vmem:[%s10] sm:$0x1]
    %v319 = vlaneseq
    %v320 = vshrl.u32 %v319, 7
    %v321 = vsub.s32 0, %v320
    %v322 = vrot.slane %v317, %v321
    %v340 = vunpack.c.l.b16 %v301
    %v341 = vunpack.c.l.b16 %v302
    %v342 = vunpack.c.l.b16 %v303
    %v343 = vunpack.c.l.b16 %v304
    %v344 = vunpack.c.l.b16 %v305
    %v345 = vunpack.c.l.b16 %v306
    %v346 = vunpack.c.l.b16 %v307
    %v347 = vunpack.c.l.b16 %v308
    %v348 = vunpack.c.l.b16 %v309
    %v349 = vunpack.c.l.b16 %v310
    %v350 = vunpack.c.l.b16 %v311
    %v351 = vunpack.c.l.b16 %v312
    %v352 = vunpack.c.l.b16 %v313
    %v353 = vunpack.c.l.b16 %v314
    %v354 = vunpack.c.l.b16 %v315
    %v355 = vunpack.c.l.b16 %v316
    %v356 = vpack.c.b16 %v341, %v340
    %v357 = vpack.c.b16 %v343, %v342
    %v358 = vpack.c.b16 %v345, %v344
    %v359 = vpack.c.b16 %v347, %v346
    %v360 = vpack.c.b16 %v349, %v348
    %v361 = vpack.c.b16 %v351, %v350
    %v362 = vpack.c.b16 %v353, %v352
    %v363 = vpack.c.b16 %v355, %v354
    %372 = vmatprep.subr.bf16.mxu0 0
    %373 = vmatpush1.bf16.msra.mxu0 %v363
    %374 = vmatprep.subr.bf16.mxu0 0
    %375 = vmatpush1.bf16.msra.mxu0 %v362
    %376 = vmatprep.subr.bf16.mxu0 0
    %377 = vmatpush1.bf16.msra.mxu0 %v361
    %378 = vmatprep.subr.bf16.mxu0 0
    %379 = vmatpush1.bf16.msra.mxu0 %v360
    %380 = vmatprep.subr.bf16.mxu0 0
    %381 = vmatpush1.bf16.msra.mxu0 %v359
    %382 = vmatprep.subr.bf16.mxu0 0
    %383 = vmatpush1.bf16.msra.mxu0 %v358
    %384 = vmatprep.subr.bf16.mxu0 0
    %385 = vmatpush1.bf16.msra.mxu0 %v357
    %386 = vmatprep.subr.bf16.mxu0 0
    %387 = vmatpush1.bf16.msra.mxu0 %v356
    %388 = vmatprep.subr.bf16.mxu0 0
    %389 = vmatpush2.bf16.msra.mxu0 0
    %390 = vmatprep.subr.bf16.mxu0 0
    %391 = vmatpush2.bf16.msra.mxu0 0
    %392 = vmatprep.subr.bf16.mxu0 0
    %393 = vmatpush2.bf16.msra.mxu0 0
    %394 = vmatprep.subr.bf16.mxu0 0
    %395 = vmatpush2.bf16.msra.mxu0 0
    %396 = vmatprep.subr.bf16.mxu0 0
    %397 = vmatpush2.bf16.msra.mxu0 0
    %398 = vmatprep.subr.bf16.mxu0 0
    %399 = vmatpush2.bf16.msra.mxu0 0
    %400 = vmatprep.subr.bf16.mxu0 0
    %401 = vmatpush2.bf16.msra.mxu0 0
    %402 = vmatprep.subr.bf16.mxu0 0
    %403 = vmatpush2.bf16.msra.mxu0 0
    %404 = vmatprep.mubr.bf16.mxu0 0
    %405 = vmatmul.mubr.bf16.gmra.mxu0 %v300
    %v406 = vpop.f32.mrf.mxu0
    %v407 = vadd.f32 %v322, %v406
    %v408 = vpop.f32.mrf.mxu0
    %v409 = vpop.f32.mrf.mxu0
    %v410 = vpop.f32.mrf.mxu0
    %411 = vdwg.mxu0
    %v412 = vmax.f32 %v407, 0.0
    %v413 = vpack.c.bf16 %v412, %v412
    %v414 = vld [vmem:[%s11] sm:$0xf]
    %v415 = vld [vmem:[%s11 + $0x4] sm:$0xf]
    %v416 = vld [vmem:[%s11 + $0x8] sm:$0xf]
    %v417 = vld [vmem:[%s11 + $0xc] sm:$0xf]
    %v418 = vld [vmem:[%s11 + $0x10] sm:$0xf]
    %v419 = vld [vmem:[%s11 + $0x14] sm:$0xf]
    %v420 = vld [vmem:[%s11 + $0x18] sm:$0xf]
    %v421 = vld [vmem:[%s11 + $0x1c] sm:$0xf]
    %v422 = vld [vmem:[%s12] sm:$0x1]
    %v424 = vlaneseq
    %v425 = vshrl.u32 %v424, 7
    %v426 = vsub.s32 0, %v425
    %v427 = vrot.slane %v422, %v426
    %v437 = vunpack.c.l.b16 %v414
    %v438 = vunpack.c.l.b16 %v415
    %v439 = vunpack.c.l.b16 %v416
    %v440 = vunpack.c.l.b16 %v417
    %v441 = vunpack.c.l.b16 %v418
    %v442 = vunpack.c.l.b16 %v419
    %v443 = vunpack.c.l.b16 %v420
    %v444 = vunpack.c.l.b16 %v421
    %v445 = vpack.c.b16 %v438, %v437
    %v446 = vpack.c.b16 %v440, %v439
    %v447 = vpack.c.b16 %v442, %v441
    %v448 = vpack.c.b16 %v444, %v443
    %vm453 = vcmask 523264
    %v455 = vsel %vm453, %v413, 0
    %457 = vmatprep.subr.bf16.mxu0 0
    %458 = vmatpush1.bf16.msra.mxu0 0
    %459 = vmatprep.subr.bf16.mxu0 0
    %460 = vmatpush1.bf16.msra.mxu0 0
    %461 = vmatprep.subr.bf16.mxu0 0
    %462 = vmatpush1.bf16.msra.mxu0 0
    %463 = vmatprep.subr.bf16.mxu0 0
    %464 = vmatpush1.bf16.msra.mxu0 0
    %465 = vmatprep.subr.bf16.mxu0 0
    %466 = vmatpush1.bf16.msra.mxu0 %v448
    %467 = vmatprep.subr.bf16.mxu0 0
    %468 = vmatpush1.bf16.msra.mxu0 %v447
    %469 = vmatprep.subr.bf16.mxu0 0
    %470 = vmatpush1.bf16.msra.mxu0 %v446
    %471 = vmatprep.subr.bf16.mxu0 0
    %472 = vmatpush1.bf16.msra.mxu0 %v445
    %473 = vmatprep.subr.bf16.mxu0 0
    %474 = vmatpush2.bf16.msra.mxu0 0
    %475 = vmatprep.subr.bf16.mxu0 0
    %476 = vmatpush2.bf16.msra.mxu0 0
    %477 = vmatprep.subr.bf16.mxu0 0
    %478 = vmatpush2.bf16.msra.mxu0 0
    %479 = vmatprep.subr.bf16.mxu0 0
    %480 = vmatpush2.bf16.msra.mxu0 0
    %481 = vmatprep.subr.bf16.mxu0 0
    %482 = vmatpush2.bf16.msra.mxu0 0
    %483 = vmatprep.subr.bf16.mxu0 0
    %484 = vmatpush2.bf16.msra.mxu0 0
    %485 = vmatprep.subr.bf16.mxu0 0
    %486 = vmatpush2.bf16.msra.mxu0 0
    %487 = vmatprep.subr.bf16.mxu0 0
    %488 = vmatpush2.bf16.msra.mxu0 0
    %489 = vmatprep.mubr.bf16.mxu0 0
    %490 = vmatmul.mubr.bf16.gmra.mxu0 %v455
    %v491 = vpop.f32.mrf.mxu0
    %v492 = vadd.f32 %v427, %v491
    %v493 = vpop.f32.mrf.mxu0
    %v494 = vpop.f32.mrf.mxu0
    %v495 = vpop.f32.mrf.mxu0
    %496 = vdwg.mxu0
    %497 = vst [vmem:[#allocation5] sm:$0xff] %v492
    // Predicated region
    $region58: #{tpu_custom_call.1} parent=1 // pred_check
      _
    $region59: #{tpu_custom_call.1} parent=1 // pred_check_branch
      %499 = sbr.rel (0) target = $region61
    $region60: #{tpu_custom_call.1} parent=1 // pred_region
      %s501 = ssub.s32 128, 128
      %502 = vsyncadd [#allocation4], %s501
      %s504 = sshll.u32 [#allocation5], 4
      %s505 = int_to_ptr.vmem [resolvable:$true] %s504
      %507 = dma.vmem_to_hbm [thread:$0]  %s505, 128, %s13, [#allocation4]
    $region61: #{tpu_custom_call.1} parent=1 // pred_fallthru
      _
    // Predicated region
    $region62: #{tpu_custom_call.1} parent=1 // pred_check
      _
    $region63: #{tpu_custom_call.1} parent=1 // pred_check_branch
      %509 = sbr.rel (0) target = $region65
    $region64: #{tpu_custom_call.1} parent=1 // pred_region
      %510 = dma.done [#allocation4], 128
    $region65: #{tpu_custom_call.1} parent=1 // pred_fallthru
      _
    %511 = vsyncpa [#allocation3], 1
    %512 = vsyncpa [#allocation4], 1

</llo_original>
